<compile_context>
chip_gen: v6e
topology: v6e:2x2x1
jax: 0.10.0
libtpu: 0.0.40
codegen_flags: <defaults>
</compile_context>

<pallas_src>
import numpy as np
import jax
import jax.numpy as jnp
from jax.experimental import pallas as pl
from jax.experimental.pallas import tpu as pltpu


# ---------------------------------------------------------------------------
# Parameter construction (deterministic, mirrors get_matrix + torch pinv).
# ---------------------------------------------------------------------------
def get_matrix_np(n_fft):
    n = np.arange(n_fft, dtype=np.float64)
    # torch.hann_window / hamming_window default to periodic=True.
    hann = 0.5 - 0.5 * np.cos(2.0 * np.pi * n / n_fft)
    hamming = 0.54 - 0.46 * np.cos(2.0 * np.pi * n / n_fft)
    window = 0.85 * hann + 0.15 * hamming
    fft_matrix = np.fft.rfft(np.eye(n_fft), axis=-1).T        # (F, n_fft), complex
    fft_matrix = fft_matrix * window[None, :]
    return fft_matrix.real, fft_matrix.imag


def make_istft_weights(n_fft):
    mr, mi = get_matrix_np(n_fft)
    # torch.linalg.pinv(matrix).T  (done in numpy at setup; this is glue).
    wr = np.linalg.pinv(mr).T                                  # (F, n_fft)
    wi = np.linalg.pinv(mi).T                                  # (F, n_fft)
    return wr.astype(np.float32), wi.astype(np.float32)


# ---------------------------------------------------------------------------
# Pallas kernel + wrapper.
# ---------------------------------------------------------------------------
def make_conv_istft(n_fft, hop_length):
    assert n_fft % hop_length == 0, "hop must divide n_fft"
    R = n_fft // hop_length                 # overlap factor
    pad = n_fft // 2
    assert pad % hop_length == 0, "n_fft//2 must be a multiple of hop"
    rows_skip = pad // hop_length           # = R // 2
    scale = n_fft / hop_length
    F = n_fft // 2 + 1

    wr_np, wi_np = make_istft_weights(n_fft)
    # Fused weight: real/imag stacked along K, 1/scale folded in at setup time.
    w_cat_np = (np.concatenate([wr_np, wi_np], axis=0) / scale).astype(np.float32)
    w_cat = jnp.asarray(w_cat_np)           # (2F, n_fft)

    def istft_kernel(x_ref, w_ref, out_ref):
        # x_ref: (1, L, 2F)   w_ref: (2F, n_fft)   out_ref: (1, L-1, hop)
        L = x_ref.shape[1]

        # Hot path 1: one fused MXU matmul (real+imag share the contraction dim).
        frames = jnp.dot(x_ref[0], w_ref[...],
                         preferred_element_type=jnp.float32)   # (L, n_fft)

        # Hot path 2: overlap-add of the ConvTranspose1d (stride=hop,
        # padding=n_fft//2), written directly into the cropped output rows:
        #   out[m, :] = sum_r frames[m + rows_skip - r, r*hop:(r+1)*hop]
        # The r == rows_skip term (shift 0) is valid for every output row,
        # so it is a pure store: no zero-init, no scratch, no crop pass.
        out_ref[0, :, :] = frames[
            0:L - 1, rows_skip * hop_length:(rows_skip + 1) * hop_length]

        for r in range(R):                   # static, unrolled (R is small)
            if r == rows_skip:
                continue
            s = rows_skip - r                # row shift for this hop-slice
            m_lo = max(0, -s)
            m_hi = min(L - 2, L - 1 - s)
            if m_lo > m_hi:
                continue
            out_ref[0, m_lo:m_hi + 1, :] += frames[
                m_lo + s:m_hi + 1 + s, r * hop_length:(r + 1) * hop_length]

    def conv_istft(real, imag):
        B, F_in, L = real.shape
        assert F_in == F
        assert L >= 2, "ConvISTFT needs at least 2 frames for a non-empty output"
        T = (L - 1) * hop_length

        # One fused layout op (concat along F + transpose, single XLA pass)
        # replacing the previous two separate input transposes; enables the
        # single (L, 2F) x (2F, n_fft) matmul in the kernel.
        x = jnp.concatenate([real, imag], axis=1).astype(jnp.float32)
        x = jnp.transpose(x, (0, 2, 1))                        # (B, L, 2F)

        out = pl.pallas_call(
            istft_kernel,
            out_shape=jax.ShapeDtypeStruct((B, L - 1, hop_length), jnp.float32),
            grid_spec=pltpu.PrefetchScalarGridSpec(
                num_scalar_prefetch=0,
                grid=(B,),
                in_specs=[
                    pl.BlockSpec((1, L, 2 * F), lambda b: (b, 0, 0)),
                    pl.BlockSpec((2 * F, n_fft), lambda b: (0, 0)),
                ],
                out_specs=pl.BlockSpec((1, L - 1, hop_length),
                                       lambda b: (b, 0, 0)),
            ),
            compiler_params=pltpu.CompilerParams(
                dimension_semantics=("parallel",),
                vmem_limit_bytes=48 * 1024 * 1024,
            ),
        )(x, w_cat)

        return out.reshape(B, 1, T)

    return conv_istft, (wr_np, wi_np)


# ---------------------------------------------------------------------------
# Pure-numpy reference (ConvTranspose1d semantics) for a correctness check.
# ---------------------------------------------------------------------------
def reference_np(real, imag, wr, wi, n_fft, hop):
    B, F, L = real.shape
    frames = (np.einsum('bfl,fk->blk', real, wr)
              + np.einsum('bfl,fk->blk', imag, wi)).astype(np.float32)
    t_full = (L - 1) * hop + n_fft
    y = np.zeros((B, t_full), np.float32)
    for l in range(L):
        y[:, l * hop:l * hop + n_fft] += frames[:, l, :]
    pad = n_fft // 2
    y = y[:, pad:pad + (L - 1) * hop] / (n_fft / hop)
    return y[:, None, :]


if __name__ == "__main__":
    n_fft, hop = 512, 128        # F = 257, overlap factor R = 4, lane-wide hop
    B, L = 2, 8                  # small shapes
    F = n_fft // 2 + 1

    conv_istft, (wr_np, wi_np) = make_conv_istft(n_fft, hop)

    key = jax.random.PRNGKey(0)
    kr, ki = jax.random.split(key)
    real = jax.random.normal(kr, (B, F, L), dtype=jnp.float32)
    imag = jax.random.normal(ki, (B, F, L), dtype=jnp.float32)

    out = jax.jit(conv_istft)(real, imag)
    out = jax.block_until_ready(out)

    assert out.shape == (B, 1, (L - 1) * hop), out.shape
    ref = reference_np(np.asarray(real), np.asarray(imag), wr_np, wi_np, n_fft, hop)
    np.testing.assert_allclose(np.asarray(out), ref, rtol=1e-3, atol=1e-4)

    print("KERNEL_OK")
</pallas_src>

<mosaic_0001>
module attributes {stable_mosaic.version = 11 : i64} {
  func.func @istft_kernel(%arg0: i32, %arg1: memref<1x8x514xf32, #tpu.memory_space<vmem>>, %arg2: memref<514x512xf32, #tpu.memory_space<vmem>>, %arg3: memref<1x7x128xf32, #tpu.memory_space<vmem>>) attributes {dimension_semantics = [#tpu.dimension_semantics<parallel>], iteration_bounds = array<i64: 2>, scalar_prefetch = 0 : i64, scratch_operands = 0 : i64, tpu.core_type = #tpu.core_type<tc>, window_params = [{transform_indices = @transform_0, window_bounds = array<i64: 1, 8, 514>}, {pipeline_mode = #tpu.pipeline_mode<synchronous>, transform_indices = @transform_1, window_bounds = array<i64: 514, 512>}, {transform_indices = @transform_2, window_bounds = array<i64: 1, 7, 128>}]} {
    %c0 = arith.constant 0 : index
    %c0_0 = arith.constant 0 : index
    %c0_1 = arith.constant 0 : index
    %0 = vector.load %arg1[%c0, %c0_0, %c0_1] : memref<1x8x514xf32, #tpu.memory_space<vmem>>, vector<1x8x514xf32>
    %1 = vector.shape_cast %0 : vector<1x8x514xf32> to vector<8x514xf32>
    %c0_2 = arith.constant 0 : index
    %c0_3 = arith.constant 0 : index
    %2 = vector.load %arg2[%c0_2, %c0_3] : memref<514x512xf32, #tpu.memory_space<vmem>>, vector<514x512xf32>
    %cst = arith.constant dense<0.000000e+00> : vector<8x512xf32>
    %3 = tpu.matmul %1, %2, %cst {dimension_numbers = #tpu.dot_dimension_numbers<[1], [0], [0], [1], [0, 0, 1, 1], [], []>} : vector<8x514xf32>, vector<514x512xf32>, vector<8x512xf32> -> vector<8x512xf32>
    %4 = vector.extract_strided_slice %3 {offsets = [0, 256], sizes = [7, 128], strides = [1, 1]} : vector<8x512xf32> to vector<7x128xf32>
    %c0_4 = arith.constant 0 : index
    %c0_5 = arith.constant 0 : index
    %c0_6 = arith.constant 0 : index
    %5 = vector.load %arg3[%c0_4, %c0_5, %c0_6] : memref<1x7x128xf32, #tpu.memory_space<vmem>>, vector<1x7x128xf32>
    %6 = vector.shape_cast %5 : vector<1x7x128xf32> to vector<7x128xf32>
    %7 = vector.shape_cast %4 : vector<7x128xf32> to vector<1x7x128xf32>
    tpu.vector_store %arg3[%c0_4, %c0_5, %c0_6], %7 {strides = array<i32>} : memref<1x7x128xf32, #tpu.memory_space<vmem>>, vector<1x7x128xf32>,
    %c0_7 = arith.constant 0 : index
    %c0_8 = arith.constant 0 : index
    %c0_9 = arith.constant 0 : index
    %8 = vector.load %arg3[%c0_7, %c0_8, %c0_9] : memref<1x7x128xf32, #tpu.memory_space<vmem>>, vector<1x6x128xf32>
    %9 = vector.shape_cast %8 : vector<1x6x128xf32> to vector<6x128xf32>
    %10 = vector.extract_strided_slice %3 {offsets = [2, 0], sizes = [6, 128], strides = [1, 1]} : vector<8x512xf32> to vector<6x128xf32>
    %11 = arith.addf %9, %10 : vector<6x128xf32>
    %c0_10 = arith.constant 0 : index
    %c0_11 = arith.constant 0 : index
    %c0_12 = arith.constant 0 : index
    %12 = vector.load %arg3[%c0_10, %c0_11, %c0_12] : memref<1x7x128xf32, #tpu.memory_space<vmem>>, vector<1x6x128xf32>
    %13 = vector.shape_cast %12 : vector<1x6x128xf32> to vector<6x128xf32>
    %14 = vector.shape_cast %11 : vector<6x128xf32> to vector<1x6x128xf32>
    tpu.vector_store %arg3[%c0_10, %c0_11, %c0_12], %14 {strides = array<i32>} : memref<1x7x128xf32, #tpu.memory_space<vmem>>, vector<1x6x128xf32>,
    %c0_13 = arith.constant 0 : index
    %c0_14 = arith.constant 0 : index
    %c0_15 = arith.constant 0 : index
    %15 = vector.load %arg3[%c0_13, %c0_14, %c0_15] : memref<1x7x128xf32, #tpu.memory_space<vmem>>, vector<1x7x128xf32>
    %16 = vector.shape_cast %15 : vector<1x7x128xf32> to vector<7x128xf32>
    %17 = vector.extract_strided_slice %3 {offsets = [1, 128], sizes = [7, 128], strides = [1, 1]} : vector<8x512xf32> to vector<7x128xf32>
    %18 = arith.addf %16, %17 : vector<7x128xf32>
    %c0_16 = arith.constant 0 : index
    %c0_17 = arith.constant 0 : index
    %c0_18 = arith.constant 0 : index
    %19 = vector.load %arg3[%c0_16, %c0_17, %c0_18] : memref<1x7x128xf32, #tpu.memory_space<vmem>>, vector<1x7x128xf32>
    %20 = vector.shape_cast %19 : vector<1x7x128xf32> to vector<7x128xf32>
    %21 = vector.shape_cast %18 : vector<7x128xf32> to vector<1x7x128xf32>
    tpu.vector_store %arg3[%c0_16, %c0_17, %c0_18], %21 {strides = array<i32>} : memref<1x7x128xf32, #tpu.memory_space<vmem>>, vector<1x7x128xf32>,
    %c0_19 = arith.constant 0 : index
    %c1 = arith.constant 1 : index
    %c0_20 = arith.constant 0 : index
    %22 = vector.load %arg3[%c0_19, %c1, %c0_20] : memref<1x7x128xf32, #tpu.memory_space<vmem>>, vector<1x6x128xf32>
    %23 = vector.shape_cast %22 : vector<1x6x128xf32> to vector<6x128xf32>
    %24 = vector.extract_strided_slice %3 {offsets = [0, 384], sizes = [6, 128], strides = [1, 1]} : vector<8x512xf32> to vector<6x128xf32>
    %25 = arith.addf %23, %24 : vector<6x128xf32>
    %c0_21 = arith.constant 0 : index
    %c1_22 = arith.constant 1 : index
    %c0_23 = arith.constant 0 : index
    %26 = vector.load %arg3[%c0_21, %c1_22, %c0_23] : memref<1x7x128xf32, #tpu.memory_space<vmem>>, vector<1x6x128xf32>
    %27 = vector.shape_cast %26 : vector<1x6x128xf32> to vector<6x128xf32>
    %28 = vector.shape_cast %25 : vector<6x128xf32> to vector<1x6x128xf32>
    tpu.vector_store %arg3[%c0_21, %c1_22, %c0_23], %28 {strides = array<i32>} : memref<1x7x128xf32, #tpu.memory_space<vmem>>, vector<1x6x128xf32>,
    return
  }
  func.func @transform_0(%arg0: i32) -> (i32, i32, i32) {
    %c0_i32 = arith.constant 0 : i32
    %c0_i32_0 = arith.constant 0 : i32
    %c0_i32_1 = arith.constant 0 : i32
    return %arg0, %c0_i32, %c0_i32_0 : i32, i32, i32
  }
  func.func @transform_1(%arg0: i32) -> (i32, i32) {
    %c0_i32 = arith.constant 0 : i32
    %c0_i32_0 = arith.constant 0 : i32
    %c0_i32_1 = arith.constant 0 : i32
    return %c0_i32, %c0_i32_0 : i32, i32
  }
  func.func @transform_2(%arg0: i32) -> (i32, i32, i32) {
    %c0_i32 = arith.constant 0 : i32
    %c0_i32_0 = arith.constant 0 : i32
    %c0_i32_1 = arith.constant 0 : i32
    return %arg0, %c0_i32, %c0_i32_0 : i32, i32, i32
  }
}

</mosaic_0001>

<llo_original>
// kernel: conv_istft.1
$region0: #{conv_istft.1}
  #allocation0 [shape = 'u32[]', space=smem, size = 0x4, offset = 0x4, fixed_abs, tag = 'smem constant byte address 0x4 - core index']
  #allocation1 [shape = 'u32[144,128]{1,0:T(1,128)}', space=vmem, size = 0x12000, scoped, tag = 'internal scratch']
  %s0 = inlined_call_operand.vmem [shape: f32[2,8,514], index: 0, kind: input, shape index: {}]
  %s1 = inlined_call_operand.hbm [shape: f32[514,512], index: 1, kind: input, shape index: {}]
  %s2 = inlined_call_operand.vmem [shape: f32[2,7,128], index: 2, kind: output, shape index: {}]
  %s3 = sld [smem:[#allocation0]]
  $region45: #{conv_istft.1} parent=0
    _
  %s5 = ssub.s32 1, %s3
  %s6 = scalar_select 0, %s5, %s3
  $region1: #{conv_istft.1} parent=0
    #allocation2 [shape = 'u8[1064960]{0}', space=vmem, size = 0x104000, scoped, tag = 'input window, operand 1, single buffered']
    #allocation3 [shape = 's32[2]{0}', space=sflag, size = 0x8, scoped, tag = 'scoped memory for conv_istft.1']
    %7 = vsyncpa [#allocation3], 0
    loop: start=0, step=1, limit=4
    $region2: #{conv_istft.1} parent=1 // loop_pre_header
      _
    $region3: #{conv_istft.1} parent=1 // loop_header
      %s9 = sphi 0, %s13
      %p10 = scmp.ge.s32.totalorder %s9, 4
      %s19 = sphi 0, %s21
      %s22 = sphi 0, %s19
      %s23 = sphi 0, %s22
      %s39 = sphi 0, %s23
      %s43 = sphi 0, %s43
      %s45 = sphi 0, %s43
      %s46 = sphi 0, %s45
      %s60 = sphi 0, %s46
      %s66 = sphi 0, %s68
      %s69 = sphi 0, %s66
      %s70 = sphi 0, %s69
      %s86 = sphi 0, %s70
    $region4: #{conv_istft.1} parent=1 // loop_header_branch
      %12 = sbr.rel (%p10) target = $region8
    $region5: #{conv_istft.1} parent=1 // loop_body
      %s14 = ssub.s32 %s9, 1
      %s15 = ssub.s32 %s9, 2
      %s16 = sadd.s32 %s9, 1
      %s17 = ssub.s32 %s9, %s16
      %p18 = scmp.eq.s32.totalorder %s17, 0
      %s20 = sadd.s32 %s19, 1
      %s21 = scalar_select %p18, %s19, %s20
      %p24 = pneg %p18
      %p25 = scmp.eq.s32.totalorder %s9, 1
      %p26 = por %p24, %p25
      %p27 = scmp.ne.s32.totalorder %s19, %s22
      %p28 = scmp.eq.s32.totalorder %s9, 0
      %p29 = por %p27, %p28
      %p30 = scmp.ne.s32.totalorder %s19, %s22
      %p31 = scmp.eq.s32.totalorder %s14, 1
      %p32 = por %p30, %p31
      %p33 = scmp.ne.s32.totalorder %s22, %s23
      %p34 = scmp.eq.s32.totalorder %s14, 0
      %p35 = por %p33, %p34
      %p36 = scmp.ne.s32.totalorder %s22, %s23
      %p37 = scmp.eq.s32.totalorder %s15, 1
      %p38 = por %p36, %p37
      %p40 = scmp.ne.s32.totalorder %s23, %s39
      %p41 = scmp.eq.s32.totalorder %s15, 0
      %p42 = por %p40, %p41
      %s44 = sadd.s32 %s43, 1
      %p47 = scmp.eq.s32.totalorder %s9, 1
      %p48 = scmp.ne.s32.totalorder %s43, %s45
      %p49 = scmp.eq.s32.totalorder %s9, 0
      %p50 = por %p48, %p49
      %p51 = scmp.ne.s32.totalorder %s43, %s45
      %p52 = scmp.eq.s32.totalorder %s14, 1
      %p53 = por %p51, %p52
      %p54 = scmp.ne.s32.totalorder %s45, %s46
      %p55 = scmp.eq.s32.totalorder %s14, 0
      %p56 = por %p54, %p55
      %p57 = scmp.ne.s32.totalorder %s45, %s46
      %p58 = scmp.eq.s32.totalorder %s15, 1
      %p59 = por %p57, %p58
      %p61 = scmp.ne.s32.totalorder %s46, %s60
      %p62 = scmp.eq.s32.totalorder %s15, 0
      %p63 = por %p61, %p62
      %s64 = ssub.s32 %s9, %s16
      %p65 = scmp.eq.s32.totalorder %s64, 0
      %s67 = sadd.s32 %s66, 1
      %s68 = scalar_select %p65, %s66, %s67
      %p71 = pneg %p65
      %p72 = scmp.eq.s32.totalorder %s9, 1
      %p73 = por %p71, %p72
      %p74 = scmp.ne.s32.totalorder %s66, %s69
      %p75 = scmp.eq.s32.totalorder %s9, 0
      %p76 = por %p74, %p75
      %p77 = scmp.ne.s32.totalorder %s66, %s69
      %p78 = scmp.eq.s32.totalorder %s14, 1
      %p79 = por %p77, %p78
      %p80 = scmp.ne.s32.totalorder %s69, %s70
      %p81 = scmp.eq.s32.totalorder %s14, 0
      %p82 = por %p80, %p81
      %p83 = scmp.ne.s32.totalorder %s69, %s70
      %p84 = scmp.eq.s32.totalorder %s15, 1
      %p85 = por %p83, %p84
      %p87 = scmp.ne.s32.totalorder %s70, %s86
      %p88 = scmp.eq.s32.totalorder %s15, 0
      %p89 = por %p87, %p88
      %p90 = scmp.le.s32.totalorder 1, %s9
      %p91 = scmp.lt.s32.totalorder %s9, 3
      %p92 = pnand %p90, %p91
      %p93 = pneg %p92
      // Predicated region
      $region9: #{conv_istft.1} parent=5 // pred_check
        _
      $region10: #{conv_istft.1} parent=5 // pred_check_branch
        %95 = sbr.rel (%p92) target = $region12
      $region11: #{conv_istft.1} parent=5 // pred_region
        %s96 = ssub.s32 %s9, 1
        // Predicated region
        $region13: #{conv_istft.1} parent=11 // pred_check
          %p97 = pneg %p56
        $region14: #{conv_istft.1} parent=11 // pred_check_branch
          %99 = sbr.rel (%p97) target = $region16
        $region15: #{conv_istft.1} parent=11 // pred_region
          %s101 = ssub.s32 33280, 33280
          %102 = vsyncadd [#allocation3], %s101
          %s103 = sshll.u32 [#allocation2], 4
          %s104 = int_to_ptr.vmem [resolvable:$true] %s103
          %109 = dma.hbm_to_vmem [thread:$0]  %s1, 33280, %s104, [#allocation3], 512, 512, 32
        $region16: #{conv_istft.1} parent=11 // pred_fallthru
          _
      $region12: #{conv_istft.1} parent=5 // pred_fallthru
        _
      %p110 = scmp.lt.s32.totalorder %s9, 2
      // Predicated region
      $region17: #{conv_istft.1} parent=5 // pred_check
        %p111 = pneg %p110
      $region18: #{conv_istft.1} parent=5 // pred_check_branch
        %113 = sbr.rel (%p111) target = $region20
      $region19: #{conv_istft.1} parent=5 // pred_region
        // Predicated region
        $region21: #{conv_istft.1} parent=19 // pred_check
          %p114 = pneg %p29
        $region22: #{conv_istft.1} parent=19 // pred_check_branch
          %116 = sbr.rel (%p114) target = $region24
        $region23: #{conv_istft.1} parent=19 // pred_region
          %p117 = scmp.lt.s32.totalorder %s9, 1
          %s118 = scalar_select %p117, %s9, 1
          %s119 = smul.addr %s118, 5
          %s120 = smul.addr %s119, 8
          %s121 = scalar_lea.vmem %s0, %s120
        $region24: #{conv_istft.1} parent=19 // pred_fallthru
          _
      $region20: #{conv_istft.1} parent=5 // pred_fallthru
        _
      %p122 = scmp.le.s32.totalorder 1, %s9
      %p123 = scmp.lt.s32.totalorder %s9, 3
      %p124 = pnand %p122, %p123
      %p125 = pneg %p124
      // Predicated region
      $region25: #{conv_istft.1} parent=5 // pred_check
        _
      $region26: #{conv_istft.1} parent=5 // pred_check_branch
        %127 = sbr.rel (%p124) target = $region28
      $region27: #{conv_istft.1} parent=5 // pred_region
        %s128 = ssub.s32 %s9, 1
        // Predicated region
        $region29: #{conv_istft.1} parent=27 // pred_check
          %p129 = pneg %p56
        $region30: #{conv_istft.1} parent=27 // pred_check_branch
          %131 = sbr.rel (%p129) target = $region32
        $region31: #{conv_istft.1} parent=27 // pred_region
          %132 = dma.done [#allocation3], 33280
        $region32: #{conv_istft.1} parent=27 // pred_fallthru
          _
        %p133 = scmp.lt.s32.totalorder %s14, 1
        %s134 = scalar_select %p133, %s14, 1
        %s135 = smul.addr %s134, 5
        %s136 = smul.addr %s135, 8
        %s137 = scalar_lea.vmem %s0, %s136
        %p138 = pneg %p35
        %p139 = pneg %p32
        %p140 = pneg %p56
        %p141 = pneg %p53
        %p142 = pneg %p82
        %p143 = pneg %p79
        %p144 = scmp.lt.s32.totalorder %s14, 1
        %s145 = scalar_select %p144, %s14, 1
        %s146 = smul.addr %s145, 8
        %s147 = scalar_lea.vmem %s2, %s146
        %p148 = scmp.lt.s32.totalorder %s14, 1
        %s149 = scalar_select %p148, %s14, 1
        %s150 = smul.addr %s149, 5
        %s151 = smul.addr %s150, 8
        %s152 = scalar_lea.vmem %s0, %s151
        %p153 = scmp.lt.s32.totalorder %s14, 1
        %s154 = scalar_select %p153, %s14, 1
        %s155 = smul.addr %s154, 8
        %s156 = scalar_lea.vmem %s2, %s155
        %v157 = vld [vmem:[%s152] sm:$0xff]
        %v158 = vld [vmem:[%s152 + $0x8] sm:$0xff]
        %v159 = vld [vmem:[%s152 + $0x10] sm:$0xff]
        %v160 = vld [vmem:[%s152 + $0x18] sm:$0xff]
        %v161 = vld [vmem:[%s152 + $0x20] sm:$0xff]
        %v162 = vld [vmem:[#allocation2] sm:$0xff]
        %v163 = vld [vmem:[#allocation2 + $0x8] sm:$0xff]
        %v164 = vld [vmem:[#allocation2 + $0x10] sm:$0xff]
        %v165 = vld [vmem:[#allocation2 + $0x18] sm:$0xff]
        %v166 = vld [vmem:[#allocation2 + $0x20] sm:$0xff]
        %v167 = vld [vmem:[#allocation2 + $0x28] sm:$0xff]
        %v168 = vld [vmem:[#allocation2 + $0x30] sm:$0xff]
        %v169 = vld [vmem:[#allocation2 + $0x38] sm:$0xff]
        %v170 = vld [vmem:[#allocation2 + $0x40] sm:$0xff]
        %v171 = vld [vmem:[#allocation2 + $0x48] sm:$0xff]
        %v172 = vld [vmem:[#allocation2 + $0x50] sm:$0xff]
        %v173 = vld [vmem:[#allocation2 + $0x58] sm:$0xff]
        %v174 = vld [vmem:[#allocation2 + $0x60] sm:$0xff]
        %v175 = vld [vmem:[#allocation2 + $0x68] sm:$0xff]
        %v176 = vld [vmem:[#allocation2 + $0x70] sm:$0xff]
        %v177 = vld [vmem:[#allocation2 + $0x78] sm:$0xff]
        %v178 = vld [vmem:[#allocation2 + $0x80] sm:$0xff]
        %v179 = vld [vmem:[#allocation2 + $0x88] sm:$0xff]
        %v180 = vld [vmem:[#allocation2 + $0x90] sm:$0xff]
        %v181 = vld [vmem:[#allocation2 + $0x98] sm:$0xff]
        %v182 = vld [vmem:[#allocation2 + $0xa0] sm:$0xff]
        %v183 = vld [vmem:[#allocation2 + $0xa8] sm:$0xff]
        %v184 = vld [vmem:[#allocation2 + $0xb0] sm:$0xff]
        %v185 = vld [vmem:[#allocation2 + $0xb8] sm:$0xff]
        %v186 = vld [vmem:[#allocation2 + $0xc0] sm:$0xff]
        %v187 = vld [vmem:[#allocation2 + $0xc8] sm:$0xff]
        %v188 = vld [vmem:[#allocation2 + $0xd0] sm:$0xff]
        %v189 = vld [vmem:[#allocation2 + $0xd8] sm:$0xff]
        %v190 = vld [vmem:[#allocation2 + $0xe0] sm:$0xff]
        %v191 = vld [vmem:[#allocation2 + $0xe8] sm:$0xff]
        %v192 = vld [vmem:[#allocation2 + $0xf0] sm:$0xff]
        %v193 = vld [vmem:[#allocation2 + $0xf8] sm:$0xff]
        %v194 = vld [vmem:[#allocation2 + $0x100] sm:$0xff]
        %v195 = vld [vmem:[#allocation2 + $0x108] sm:$0xff]
        %v196 = vld [vmem:[#allocation2 + $0x110] sm:$0xff]
        %v197 = vld [vmem:[#allocation2 + $0x118] sm:$0xff]
        %v198 = vld [vmem:[#allocation2 + $0x120] sm:$0xff]
        %v199 = vld [vmem:[#allocation2 + $0x128] sm:$0xff]
        %v200 = vld [vmem:[#allocation2 + $0x130] sm:$0xff]
        %v201 = vld [vmem:[#allocation2 + $0x138] sm:$0xff]
        %v202 = vld [vmem:[#allocation2 + $0x140] sm:$0xff]
        %v203 = vld [vmem:[#allocation2 + $0x148] sm:$0xff]
        %v204 = vld [vmem:[#allocation2 + $0x150] sm:$0xff]
        %v205 = vld [vmem:[#allocation2 + $0x158] sm:$0xff]
        %v206 = vld [vmem:[#allocation2 + $0x160] sm:$0xff]
        %v207 = vld [vmem:[#allocation2 + $0x168] sm:$0xff]
        %v208 = vld [vmem:[#allocation2 + $0x170] sm:$0xff]
        %v209 = vld [vmem:[#allocation2 + $0x178] sm:$0xff]
        %v210 = vld [vmem:[#allocation2 + $0x180] sm:$0xff]
        %v211 = vld [vmem:[#allocation2 + $0x188] sm:$0xff]
        %v212 = vld [vmem:[#allocation2 + $0x190] sm:$0xff]
        %v213 = vld [vmem:[#allocation2 + $0x198] sm:$0xff]
        %v214 = vld [vmem:[#allocation2 + $0x1a0] sm:$0xff]
        %v215 = vld [vmem:[#allocation2 + $0x1a8] sm:$0xff]
        %v216 = vld [vmem:[#allocation2 + $0x1b0] sm:$0xff]
        %v217 = vld [vmem:[#allocation2 + $0x1b8] sm:$0xff]
        %v218 = vld [vmem:[#allocation2 + $0x1c0] sm:$0xff]
        %v219 = vld [vmem:[#allocation2 + $0x1c8] sm:$0xff]
        %v220 = vld [vmem:[#allocation2 + $0x1d0] sm:$0xff]
        %v221 = vld [vmem:[#allocation2 + $0x1d8] sm:$0xff]
        %v222 = vld [vmem:[#allocation2 + $0x1e0] sm:$0xff]
        %v223 = vld [vmem:[#allocation2 + $0x1e8] sm:$0xff]
        %v224 = vld [vmem:[#allocation2 + $0x1f0] sm:$0xff]
        %v225 = vld [vmem:[#allocation2 + $0x1f8] sm:$0xff]
        %v226 = vld [vmem:[#allocation2 + $0x200] sm:$0xff]
        %v227 = vld [vmem:[#allocation2 + $0x208] sm:$0xff]
        %v228 = vld [vmem:[#allocation2 + $0x210] sm:$0xff]
        %v229 = vld [vmem:[#allocation2 + $0x218] sm:$0xff]
        %v230 = vld [vmem:[#allocation2 + $0x220] sm:$0xff]
        %v231 = vld [vmem:[#allocation2 + $0x228] sm:$0xff]
        %v232 = vld [vmem:[#allocation2 + $0x230] sm:$0xff]
        %v233 = vld [vmem:[#allocation2 + $0x238] sm:$0xff]
        %v234 = vld [vmem:[#allocation2 + $0x240] sm:$0xff]
        %v235 = vld [vmem:[#allocation2 + $0x248] sm:$0xff]
        %v236 = vld [vmem:[#allocation2 + $0x250] sm:$0xff]
        %v237 = vld [vmem:[#allocation2 + $0x258] sm:$0xff]
        %v238 = vld [vmem:[#allocation2 + $0x260] sm:$0xff]
        %v239 = vld [vmem:[#allocation2 + $0x268] sm:$0xff]
        %v240 = vld [vmem:[#allocation2 + $0x270] sm:$0xff]
        %v241 = vld [vmem:[#allocation2 + $0x278] sm:$0xff]
        %v242 = vld [vmem:[#allocation2 + $0x280] sm:$0xff]
        %v243 = vld [vmem:[#allocation2 + $0x288] sm:$0xff]
        %v244 = vld [vmem:[#allocation2 + $0x290] sm:$0xff]
        %v245 = vld [vmem:[#allocation2 + $0x298] sm:$0xff]
        %v246 = vld [vmem:[#allocation2 + $0x2a0] sm:$0xff]
        %v247 = vld [vmem:[#allocation2 + $0x2a8] sm:$0xff]
        %v248 = vld [vmem:[#allocation2 + $0x2b0] sm:$0xff]
        %v249 = vld [vmem:[#allocation2 + $0x2b8] sm:$0xff]
        %v250 = vld [vmem:[#allocation2 + $0x2c0] sm:$0xff]
        %v251 = vld [vmem:[#allocation2 + $0x2c8] sm:$0xff]
        %v252 = vld [vmem:[#allocation2 + $0x2d0] sm:$0xff]
        %v253 = vld [vmem:[#allocation2 + $0x2d8] sm:$0xff]
        %v254 = vld [vmem:[#allocation2 + $0x2e0] sm:$0xff]
        %v255 = vld [vmem:[#allocation2 + $0x2e8] sm:$0xff]
        %v256 = vld [vmem:[#allocation2 + $0x2f0] sm:$0xff]
        %v257 = vld [vmem:[#allocation2 + $0x2f8] sm:$0xff]
        %v258 = vld [vmem:[#allocation2 + $0x300] sm:$0xff]
        %v259 = vld [vmem:[#allocation2 + $0x308] sm:$0xff]
        %v260 = vld [vmem:[#allocation2 + $0x310] sm:$0xff]
        %v261 = vld [vmem:[#allocation2 + $0x318] sm:$0xff]
        %v262 = vld [vmem:[#allocation2 + $0x320] sm:$0xff]
        %v263 = vld [vmem:[#allocation2 + $0x328] sm:$0xff]
        %v264 = vld [vmem:[#allocation2 + $0x330] sm:$0xff]
        %v265 = vld [vmem:[#allocation2 + $0x338] sm:$0xff]
        %v266 = vld [vmem:[#allocation2 + $0x340] sm:$0xff]
        %v267 = vld [vmem:[#allocation2 + $0x348] sm:$0xff]
        %v268 = vld [vmem:[#allocation2 + $0x350] sm:$0xff]
        %v269 = vld [vmem:[#allocation2 + $0x358] sm:$0xff]
        %v270 = vld [vmem:[#allocation2 + $0x360] sm:$0xff]
        %v271 = vld [vmem:[#allocation2 + $0x368] sm:$0xff]
        %v272 = vld [vmem:[#allocation2 + $0x370] sm:$0xff]
        %v273 = vld [vmem:[#allocation2 + $0x378] sm:$0xff]
        %v274 = vld [vmem:[#allocation2 + $0x380] sm:$0xff]
        %v275 = vld [vmem:[#allocation2 + $0x388] sm:$0xff]
        %v276 = vld [vmem:[#allocation2 + $0x390] sm:$0xff]
        %v277 = vld [vmem:[#allocation2 + $0x398] sm:$0xff]
        %v278 = vld [vmem:[#allocation2 + $0x3a0] sm:$0xff]
        %v279 = vld [vmem:[#allocation2 + $0x3a8] sm:$0xff]
        %v280 = vld [vmem:[#allocation2 + $0x3b0] sm:$0xff]
        %v281 = vld [vmem:[#allocation2 + $0x3b8] sm:$0xff]
        %v282 = vld [vmem:[#allocation2 + $0x3c0] sm:$0xff]
        %v283 = vld [vmem:[#allocation2 + $0x3c8] sm:$0xff]
        %v284 = vld [vmem:[#allocation2 + $0x3d0] sm:$0xff]
        %v285 = vld [vmem:[#allocation2 + $0x3d8] sm:$0xff]
        %v286 = vld [vmem:[#allocation2 + $0x3e0] sm:$0xff]
        %v287 = vld [vmem:[#allocation2 + $0x3e8] sm:$0xff]
        %v288 = vld [vmem:[#allocation2 + $0x3f0] sm:$0xff]
        %v289 = vld [vmem:[#allocation2 + $0x3f8] sm:$0xff]
        %v290 = vld [vmem:[#allocation2 + $0x400] sm:$0xff]
        %v291 = vld [vmem:[#allocation2 + $0x408] sm:$0xff]
        %v292 = vld [vmem:[#allocation2 + $0x410] sm:$0xff]
        %v293 = vld [vmem:[#allocation2 + $0x418] sm:$0xff]
        %v294 = vld [vmem:[#allocation2 + $0x420] sm:$0xff]
        %v295 = vld [vmem:[#allocation2 + $0x428] sm:$0xff]
        %v296 = vld [vmem:[#allocation2 + $0x430] sm:$0xff]
        %v297 = vld [vmem:[#allocation2 + $0x438] sm:$0xff]
        %v298 = vld [vmem:[#allocation2 + $0x440] sm:$0xff]
        %v299 = vld [vmem:[#allocation2 + $0x448] sm:$0xff]
        %v300 = vld [vmem:[#allocation2 + $0x450] sm:$0xff]
        %v301 = vld [vmem:[#allocation2 + $0x458] sm:$0xff]
        %v302 = vld [vmem:[#allocation2 + $0x460] sm:$0xff]
        %v303 = vld [vmem:[#allocation2 + $0x468] sm:$0xff]
        %v304 = vld [vmem:[#allocation2 + $0x470] sm:$0xff]
        %v305 = vld [vmem:[#allocation2 + $0x478] sm:$0xff]
        %v306 = vld [vmem:[#allocation2 + $0x480] sm:$0xff]
        %v307 = vld [vmem:[#allocation2 + $0x488] sm:$0xff]
        %v308 = vld [vmem:[#allocation2 + $0x490] sm:$0xff]
        %v309 = vld [vmem:[#allocation2 + $0x498] sm:$0xff]
        %v310 = vld [vmem:[#allocation2 + $0x4a0] sm:$0xff]
        %v311 = vld [vmem:[#allocation2 + $0x4a8] sm:$0xff]
        %v312 = vld [vmem:[#allocation2 + $0x4b0] sm:$0xff]
        %v313 = vld [vmem:[#allocation2 + $0x4b8] sm:$0xff]
        %v314 = vld [vmem:[#allocation2 + $0x4c0] sm:$0xff]
        %v315 = vld [vmem:[#allocation2 + $0x4c8] sm:$0xff]
        %v316 = vld [vmem:[#allocation2 + $0x4d0] sm:$0xff]
        %v317 = vld [vmem:[#allocation2 + $0x4d8] sm:$0xff]
        %v318 = vld [vmem:[#allocation2 + $0x4e0] sm:$0xff]
        %v319 = vld [vmem:[#allocation2 + $0x4e8] sm:$0xff]
        %v320 = vld [vmem:[#allocation2 + $0x4f0] sm:$0xff]
        %v321 = vld [vmem:[#allocation2 + $0x4f8] sm:$0xff]
        %v322 = vld [vmem:[#allocation2 + $0x500] sm:$0xff]
        %v323 = vld [vmem:[#allocation2 + $0x508] sm:$0xff]
        %v324 = vld [vmem:[#allocation2 + $0x510] sm:$0xff]
        %v325 = vld [vmem:[#allocation2 + $0x518] sm:$0xff]
        %v326 = vld [vmem:[#allocation2 + $0x520] sm:$0xff]
        %v327 = vld [vmem:[#allocation2 + $0x528] sm:$0xff]
        %v328 = vld [vmem:[#allocation2 + $0x530] sm:$0xff]
        %v329 = vld [vmem:[#allocation2 + $0x538] sm:$0xff]
        %v330 = vld [vmem:[#allocation2 + $0x540] sm:$0xff]
        %v331 = vld [vmem:[#allocation2 + $0x548] sm:$0xff]
        %v332 = vld [vmem:[#allocation2 + $0x550] sm:$0xff]
        %v333 = vld [vmem:[#allocation2 + $0x558] sm:$0xff]
        %v334 = vld [vmem:[#allocation2 + $0x560] sm:$0xff]
        %v335 = vld [vmem:[#allocation2 + $0x568] sm:$0xff]
        %v336 = vld [vmem:[#allocation2 + $0x570] sm:$0xff]
        %v337 = vld [vmem:[#allocation2 + $0x578] sm:$0xff]
        %v338 = vld [vmem:[#allocation2 + $0x580] sm:$0xff]
        %v339 = vld [vmem:[#allocation2 + $0x588] sm:$0xff]
        %v340 = vld [vmem:[#allocation2 + $0x590] sm:$0xff]
        %v341 = vld [vmem:[#allocation2 + $0x598] sm:$0xff]
        %v342 = vld [vmem:[#allocation2 + $0x5a0] sm:$0xff]
        %v343 = vld [vmem:[#allocation2 + $0x5a8] sm:$0xff]
        %v344 = vld [vmem:[#allocation2 + $0x5b0] sm:$0xff]
        %v345 = vld [vmem:[#allocation2 + $0x5b8] sm:$0xff]
        %v346 = vld [vmem:[#allocation2 + $0x5c0] sm:$0xff]
        %v347 = vld [vmem:[#allocation2 + $0x5c8] sm:$0xff]
        %v348 = vld [vmem:[#allocation2 + $0x5d0] sm:$0xff]
        %v349 = vld [vmem:[#allocation2 + $0x5d8] sm:$0xff]
        %v350 = vld [vmem:[#allocation2 + $0x5e0] sm:$0xff]
        %v351 = vld [vmem:[#allocation2 + $0x5e8] sm:$0xff]
        %v352 = vld [vmem:[#allocation2 + $0x5f0] sm:$0xff]
        %v353 = vld [vmem:[#allocation2 + $0x5f8] sm:$0xff]
        %v354 = vld [vmem:[#allocation2 + $0x600] sm:$0xff]
        %v355 = vld [vmem:[#allocation2 + $0x608] sm:$0xff]
        %v356 = vld [vmem:[#allocation2 + $0x610] sm:$0xff]
        %v357 = vld [vmem:[#allocation2 + $0x618] sm:$0xff]
        %v358 = vld [vmem:[#allocation2 + $0x620] sm:$0xff]
        %v359 = vld [vmem:[#allocation2 + $0x628] sm:$0xff]
        %v360 = vld [vmem:[#allocation2 + $0x630] sm:$0xff]
        %v361 = vld [vmem:[#allocation2 + $0x638] sm:$0xff]
        %v362 = vld [vmem:[#allocation2 + $0x640] sm:$0xff]
        %v363 = vld [vmem:[#allocation2 + $0x648] sm:$0xff]
        %v364 = vld [vmem:[#allocation2 + $0x650] sm:$0xff]
        %v365 = vld [vmem:[#allocation2 + $0x658] sm:$0xff]
        %v366 = vld [vmem:[#allocation2 + $0x660] sm:$0xff]
        %v367 = vld [vmem:[#allocation2 + $0x668] sm:$0xff]
        %v368 = vld [vmem:[#allocation2 + $0x670] sm:$0xff]
        %v369 = vld [vmem:[#allocation2 + $0x678] sm:$0xff]
        %v370 = vld [vmem:[#allocation2 + $0x680] sm:$0xff]
        %v371 = vld [vmem:[#allocation2 + $0x688] sm:$0xff]
        %v372 = vld [vmem:[#allocation2 + $0x690] sm:$0xff]
        %v373 = vld [vmem:[#allocation2 + $0x698] sm:$0xff]
        %v374 = vld [vmem:[#allocation2 + $0x6a0] sm:$0xff]
        %v375 = vld [vmem:[#allocation2 + $0x6a8] sm:$0xff]
        %v376 = vld [vmem:[#allocation2 + $0x6b0] sm:$0xff]
        %v377 = vld [vmem:[#allocation2 + $0x6b8] sm:$0xff]
        %v378 = vld [vmem:[#allocation2 + $0x6c0] sm:$0xff]
        %v379 = vld [vmem:[#allocation2 + $0x6c8] sm:$0xff]
        %v380 = vld [vmem:[#allocation2 + $0x6d0] sm:$0xff]
        %v381 = vld [vmem:[#allocation2 + $0x6d8] sm:$0xff]
        %v382 = vld [vmem:[#allocation2 + $0x6e0] sm:$0xff]
        %v383 = vld [vmem:[#allocation2 + $0x6e8] sm:$0xff]
        %v384 = vld [vmem:[#allocation2 + $0x6f0] sm:$0xff]
        %v385 = vld [vmem:[#allocation2 + $0x6f8] sm:$0xff]
        %v386 = vld [vmem:[#allocation2 + $0x700] sm:$0xff]
        %v387 = vld [vmem:[#allocation2 + $0x708] sm:$0xff]
        %v388 = vld [vmem:[#allocation2 + $0x710] sm:$0xff]
        %v389 = vld [vmem:[#allocation2 + $0x718] sm:$0xff]
        %v390 = vld [vmem:[#allocation2 + $0x720] sm:$0xff]
        %v391 = vld [vmem:[#allocation2 + $0x728] sm:$0xff]
        %v392 = vld [vmem:[#allocation2 + $0x730] sm:$0xff]
        %v393 = vld [vmem:[#allocation2 + $0x738] sm:$0xff]
        %v394 = vld [vmem:[#allocation2 + $0x740] sm:$0xff]
        %v395 = vld [vmem:[#allocation2 + $0x748] sm:$0xff]
        %v396 = vld [vmem:[#allocation2 + $0x750] sm:$0xff]
        %v397 = vld [vmem:[#allocation2 + $0x758] sm:$0xff]
        %v398 = vld [vmem:[#allocation2 + $0x760] sm:$0xff]
        %v399 = vld [vmem:[#allocation2 + $0x768] sm:$0xff]
        %v400 = vld [vmem:[#allocation2 + $0x770] sm:$0xff]
        %v401 = vld [vmem:[#allocation2 + $0x778] sm:$0xff]
        %v402 = vld [vmem:[#allocation2 + $0x780] sm:$0xff]
        %v403 = vld [vmem:[#allocation2 + $0x788] sm:$0xff]
        %v404 = vld [vmem:[#allocation2 + $0x790] sm:$0xff]
        %v405 = vld [vmem:[#allocation2 + $0x798] sm:$0xff]
        %v406 = vld [vmem:[#allocation2 + $0x7a0] sm:$0xff]
        %v407 = vld [vmem:[#allocation2 + $0x7a8] sm:$0xff]
        %v408 = vld [vmem:[#allocation2 + $0x7b0] sm:$0xff]
        %v409 = vld [vmem:[#allocation2 + $0x7b8] sm:$0xff]
        %v410 = vld [vmem:[#allocation2 + $0x7c0] sm:$0xff]
        %v411 = vld [vmem:[#allocation2 + $0x7c8] sm:$0xff]
        %v412 = vld [vmem:[#allocation2 + $0x7d0] sm:$0xff]
        %v413 = vld [vmem:[#allocation2 + $0x7d8] sm:$0xff]
        %v414 = vld [vmem:[#allocation2 + $0x7e0] sm:$0xff]
        %v415 = vld [vmem:[#allocation2 + $0x7e8] sm:$0xff]
        %v416 = vld [vmem:[#allocation2 + $0x7f0] sm:$0xff]
        %v417 = vld [vmem:[#allocation2 + $0x7f8] sm:$0xff]
        %v418 = vld [vmem:[#allocation2 + $0x800] sm:$0x3]
        %v419 = vld [vmem:[#allocation2 + $0x808] sm:$0x3]
        %v420 = vld [vmem:[#allocation2 + $0x810] sm:$0x3]
        %v421 = vld [vmem:[#allocation2 + $0x818] sm:$0x3]
        %vm422 = vcmask 15360
        %v424 = vsel %vm422, %v161, 0
        %vm426 = vcmask 1041408
        %v428 = vsel %vm426, %v418, 0
        %v431 = vsel %vm426, %v419, 0
        %v434 = vsel %vm426, %v420, 0
        %v437 = vsel %vm426, %v421, 0
        %439 = vmatprep.subr.mxu0 %v223
        %440 = vmatpush1.msra.mxu0 %v222
        %441 = vmatprep.subr.mxu0 %v219
        %442 = vmatpush1.msra.mxu0 %v218
        %443 = vmatprep.subr.mxu0 %v215
        %444 = vmatpush1.msra.mxu0 %v214
        %445 = vmatprep.subr.mxu0 %v211
        %446 = vmatpush1.msra.mxu0 %v210
        %447 = vmatprep.subr.mxu0 %v207
        %448 = vmatpush1.msra.mxu0 %v206
        %449 = vmatprep.subr.mxu0 %v203
        %450 = vmatpush1.msra.mxu0 %v202
        %451 = vmatprep.subr.mxu0 %v199
        %452 = vmatpush1.msra.mxu0 %v198
        %453 = vmatprep.subr.mxu0 %v195
        %454 = vmatpush1.msra.mxu0 %v194
        %455 = vmatprep.subr.mxu0 %v191
        %456 = vmatpush1.msra.mxu0 %v190
        %457 = vmatprep.subr.mxu0 %v187
        %458 = vmatpush1.msra.mxu0 %v186
        %459 = vmatprep.subr.mxu0 %v183
        %460 = vmatpush1.msra.mxu0 %v182
        %461 = vmatprep.subr.mxu0 %v179
        %462 = vmatpush1.msra.mxu0 %v178
        %463 = vmatprep.subr.mxu0 %v175
        %464 = vmatpush1.msra.mxu0 %v174
        %465 = vmatprep.subr.mxu0 %v171
        %466 = vmatpush1.msra.mxu0 %v170
        %467 = vmatprep.subr.mxu0 %v167
        %468 = vmatpush1.msra.mxu0 %v166
        %469 = vmatprep.subr.mxu0 %v163
        %470 = vmatpush1.msra.mxu0 %v162
        %471 = vmatprep.subr.mxu0 %v287
        %472 = vmatpush2.msra.mxu0 %v286
        %473 = vmatprep.subr.mxu0 %v283
        %474 = vmatpush2.msra.mxu0 %v282
        %475 = vmatprep.subr.mxu0 %v279
        %476 = vmatpush2.msra.mxu0 %v278
        %477 = vmatprep.subr.mxu0 %v275
        %478 = vmatpush2.msra.mxu0 %v274
        %479 = vmatprep.subr.mxu0 %v271
        %480 = vmatpush2.msra.mxu0 %v270
        %481 = vmatprep.subr.mxu0 %v267
        %482 = vmatpush2.msra.mxu0 %v266
        %483 = vmatprep.subr.mxu0 %v263
        %484 = vmatpush2.msra.mxu0 %v262
        %485 = vmatprep.subr.mxu0 %v259
        %486 = vmatpush2.msra.mxu0 %v258
        %487 = vmatprep.subr.mxu0 %v255
        %488 = vmatpush2.msra.mxu0 %v254
        %489 = vmatprep.subr.mxu0 %v251
        %490 = vmatpush2.msra.mxu0 %v250
        %491 = vmatprep.subr.mxu0 %v247
        %492 = vmatpush2.msra.mxu0 %v246
        %493 = vmatprep.subr.mxu0 %v243
        %494 = vmatpush2.msra.mxu0 %v242
        %495 = vmatprep.subr.mxu0 %v239
        %496 = vmatpush2.msra.mxu0 %v238
        %497 = vmatprep.subr.mxu0 %v235
        %498 = vmatpush2.msra.mxu0 %v234
        %499 = vmatprep.subr.mxu0 %v231
        %500 = vmatpush2.msra.mxu0 %v230
        %501 = vmatprep.subr.mxu0 %v227
        %502 = vmatpush2.msra.mxu0 %v226
        %503 = vmatprep.mubr.f32.mxu0 %v158
        %504 = vmatmul.mubr.f32.gmra.mxu0 %v157
        %v505 = vpop.f32.mrf.mxu0
        %v506 = vadd.f32 0.0, %v505
        %v507 = vpop.f32.mrf.mxu0
        %v508 = vadd.f32 0.0, %v507
        %509 = vdwg.mxu0
        %510 = vmatprep.subr.mxu0 %v351
        %511 = vmatpush1.msra.mxu0 %v350
        %512 = vmatprep.subr.mxu0 %v347
        %513 = vmatpush1.msra.mxu0 %v346
        %514 = vmatprep.subr.mxu0 %v343
        %515 = vmatpush1.msra.mxu0 %v342
        %516 = vmatprep.subr.mxu0 %v339
        %517 = vmatpush1.msra.mxu0 %v338
        %518 = vmatprep.subr.mxu0 %v335
        %519 = vmatpush1.msra.mxu0 %v334
        %520 = vmatprep.subr.mxu0 %v331
        %521 = vmatpush1.msra.mxu0 %v330
        %522 = vmatprep.subr.mxu0 %v327
        %523 = vmatpush1.msra.mxu0 %v326
        %524 = vmatprep.subr.mxu0 %v323
        %525 = vmatpush1.msra.mxu0 %v322
        %526 = vmatprep.subr.mxu0 %v319
        %527 = vmatpush1.msra.mxu0 %v318
        %528 = vmatprep.subr.mxu0 %v315
        %529 = vmatpush1.msra.mxu0 %v314
        %530 = vmatprep.subr.mxu0 %v311
        %531 = vmatpush1.msra.mxu0 %v310
        %532 = vmatprep.subr.mxu0 %v307
        %533 = vmatpush1.msra.mxu0 %v306
        %534 = vmatprep.subr.mxu0 %v303
        %535 = vmatpush1.msra.mxu0 %v302
        %536 = vmatprep.subr.mxu0 %v299
        %537 = vmatpush1.msra.mxu0 %v298
        %538 = vmatprep.subr.mxu0 %v295
        %539 = vmatpush1.msra.mxu0 %v294
        %540 = vmatprep.subr.mxu0 %v291
        %541 = vmatpush1.msra.mxu0 %v290
        %542 = vmatprep.subr.mxu0 %v415
        %543 = vmatpush2.msra.mxu0 %v414
        %544 = vmatprep.subr.mxu0 %v411
        %545 = vmatpush2.msra.mxu0 %v410
        %546 = vmatprep.subr.mxu0 %v407
        %547 = vmatpush2.msra.mxu0 %v406
        %548 = vmatprep.subr.mxu0 %v403
        %549 = vmatpush2.msra.mxu0 %v402
        %550 = vmatprep.subr.mxu0 %v399
        %551 = vmatpush2.msra.mxu0 %v398
        %552 = vmatprep.subr.mxu0 %v395
        %553 = vmatpush2.msra.mxu0 %v394
        %554 = vmatprep.subr.mxu0 %v391
        %555 = vmatpush2.msra.mxu0 %v390
        %556 = vmatprep.subr.mxu0 %v387
        %557 = vmatpush2.msra.mxu0 %v386
        %558 = vmatprep.subr.mxu0 %v383
        %559 = vmatpush2.msra.mxu0 %v382
        %560 = vmatprep.subr.mxu0 %v379
        %561 = vmatpush2.msra.mxu0 %v378
        %562 = vmatprep.subr.mxu0 %v375
        %563 = vmatpush2.msra.mxu0 %v374
        %564 = vmatprep.subr.mxu0 %v371
        %565 = vmatpush2.msra.mxu0 %v370
        %566 = vmatprep.subr.mxu0 %v367
        %567 = vmatpush2.msra.mxu0 %v366
        %568 = vmatprep.subr.mxu0 %v363
        %569 = vmatpush2.msra.mxu0 %v362
        %570 = vmatprep.subr.mxu0 %v359
        %571 = vmatpush2.msra.mxu0 %v358
        %572 = vmatprep.subr.mxu0 %v355
        %573 = vmatpush2.msra.mxu0 %v354
        %574 = vmatprep.mubr.f32.mxu0 %v160
        %575 = vmatmul.mubr.f32.gmra.mxu0 %v159
        %v576 = vpop.f32.mrf.mxu0
        %v577 = vadd.f32 %v506, %v576
        %v578 = vpop.f32.mrf.mxu0
        %v579 = vadd.f32 %v508, %v578
        %580 = vdwg.mxu0
        %581 = vmatprep.subr.mxu0 0.0
        %582 = vmatpush1.msra.mxu0 0.0
        %583 = vmatprep.subr.mxu0 0.0
        %584 = vmatpush1.msra.mxu0 0.0
        %585 = vmatprep.subr.mxu0 0.0
        %586 = vmatpush1.msra.mxu0 0.0
        %587 = vmatprep.subr.mxu0 0.0
        %588 = vmatpush1.msra.mxu0 0.0
        %589 = vmatprep.subr.mxu0 0.0
        %590 = vmatpush1.msra.mxu0 0.0
        %591 = vmatprep.subr.mxu0 0.0
        %592 = vmatpush1.msra.mxu0 0.0
        %593 = vmatprep.subr.mxu0 0.0
        %594 = vmatpush1.msra.mxu0 0.0
        %595 = vmatprep.subr.mxu0 0.0
        %596 = vmatpush1.msra.mxu0 0.0
        %597 = vmatprep.subr.mxu0 0.0
        %598 = vmatpush1.msra.mxu0 0.0
        %599 = vmatprep.subr.mxu0 0.0
        %600 = vmatpush1.msra.mxu0 0.0
        %601 = vmatprep.subr.mxu0 0.0
        %602 = vmatpush1.msra.mxu0 0.0
        %603 = vmatprep.subr.mxu0 0.0
        %604 = vmatpush1.msra.mxu0 0.0
        %605 = vmatprep.subr.mxu0 0.0
        %606 = vmatpush1.msra.mxu0 0.0
        %607 = vmatprep.subr.mxu0 0.0
        %608 = vmatpush1.msra.mxu0 0.0
        %609 = vmatprep.subr.mxu0 0.0
        %610 = vmatpush1.msra.mxu0 0.0
        %611 = vmatprep.subr.mxu0 %v431
        %612 = vmatpush1.msra.mxu0 %v428
        %613 = vmatprep.subr.mxu0 0.0
        %614 = vmatpush2.msra.mxu0 0.0
        %615 = vmatprep.subr.mxu0 0.0
        %616 = vmatpush2.msra.mxu0 0.0
        %617 = vmatprep.subr.mxu0 0.0
        %618 = vmatpush2.msra.mxu0 0.0
        %619 = vmatprep.subr.mxu0 0.0
        %620 = vmatpush2.msra.mxu0 0.0
        %621 = vmatprep.subr.mxu0 0.0
        %622 = vmatpush2.msra.mxu0 0.0
        %623 = vmatprep.subr.mxu0 0.0
        %624 = vmatpush2.msra.mxu0 0.0
        %625 = vmatprep.subr.mxu0 0.0
        %626 = vmatpush2.msra.mxu0 0.0
        %627 = vmatprep.subr.mxu0 0.0
        %628 = vmatpush2.msra.mxu0 0.0
        %629 = vmatprep.subr.mxu0 0.0
        %630 = vmatpush2.msra.mxu0 0.0
        %631 = vmatprep.subr.mxu0 0.0
        %632 = vmatpush2.msra.mxu0 0.0
        %633 = vmatprep.subr.mxu0 0.0
        %634 = vmatpush2.msra.mxu0 0.0
        %635 = vmatprep.subr.mxu0 0.0
        %636 = vmatpush2.msra.mxu0 0.0
        %637 = vmatprep.subr.mxu0 0.0
        %638 = vmatpush2.msra.mxu0 0.0
        %639 = vmatprep.subr.mxu0 0.0
        %640 = vmatpush2.msra.mxu0 0.0
        %641 = vmatprep.subr.mxu0 0.0
        %642 = vmatpush2.msra.mxu0 0.0
        %643 = vmatprep.subr.mxu0 0.0
        %644 = vmatpush2.msra.mxu0 0.0
        %645 = vmatprep.mubr.f32.mxu0 0.0
        %646 = vmatmul.mubr.f32.gmra.mxu0 %v424
        %v647 = vpop.f32.mrf.mxu0
        %v648 = vadd.f32 %v577, %v647
        %v649 = vpop.f32.mrf.mxu0
        %v650 = vadd.f32 %v579, %v649
        %651 = vdwg.mxu0
        %652 = vmatprep.subr.mxu0 %v225
        %653 = vmatpush1.msra.mxu0 %v224
        %654 = vmatprep.subr.mxu0 %v221
        %655 = vmatpush1.msra.mxu0 %v220
        %656 = vmatprep.subr.mxu0 %v217
        %657 = vmatpush1.msra.mxu0 %v216
        %658 = vmatprep.subr.mxu0 %v213
        %659 = vmatpush1.msra.mxu0 %v212
        %660 = vmatprep.subr.mxu0 %v209
        %661 = vmatpush1.msra.mxu0 %v208
        %662 = vmatprep.subr.mxu0 %v205
        %663 = vmatpush1.msra.mxu0 %v204
        %664 = vmatprep.subr.mxu0 %v201
        %665 = vmatpush1.msra.mxu0 %v200
        %666 = vmatprep.subr.mxu0 %v197
        %667 = vmatpush1.msra.mxu0 %v196
        %668 = vmatprep.subr.mxu0 %v193
        %669 = vmatpush1.msra.mxu0 %v192
        %670 = vmatprep.subr.mxu0 %v189
        %671 = vmatpush1.msra.mxu0 %v188
        %672 = vmatprep.subr.mxu0 %v185
        %673 = vmatpush1.msra.mxu0 %v184
        %674 = vmatprep.subr.mxu0 %v181
        %675 = vmatpush1.msra.mxu0 %v180
        %676 = vmatprep.subr.mxu0 %v177
        %677 = vmatpush1.msra.mxu0 %v176
        %678 = vmatprep.subr.mxu0 %v173
        %679 = vmatpush1.msra.mxu0 %v172
        %680 = vmatprep.subr.mxu0 %v169
        %681 = vmatpush1.msra.mxu0 %v168
        %682 = vmatprep.subr.mxu0 %v165
        %683 = vmatpush1.msra.mxu0 %v164
        %684 = vmatprep.subr.mxu0 %v289
        %685 = vmatpush2.msra.mxu0 %v288
        %686 = vmatprep.subr.mxu0 %v285
        %687 = vmatpush2.msra.mxu0 %v284
        %688 = vmatprep.subr.mxu0 %v281
        %689 = vmatpush2.msra.mxu0 %v280
        %690 = vmatprep.subr.mxu0 %v277
        %691 = vmatpush2.msra.mxu0 %v276
        %692 = vmatprep.subr.mxu0 %v273
        %693 = vmatpush2.msra.mxu0 %v272
        %694 = vmatprep.subr.mxu0 %v269
        %695 = vmatpush2.msra.mxu0 %v268
        %696 = vmatprep.subr.mxu0 %v265
        %697 = vmatpush2.msra.mxu0 %v264
        %698 = vmatprep.subr.mxu0 %v261
        %699 = vmatpush2.msra.mxu0 %v260
        %700 = vmatprep.subr.mxu0 %v257
        %701 = vmatpush2.msra.mxu0 %v256
        %702 = vmatprep.subr.mxu0 %v253
        %703 = vmatpush2.msra.mxu0 %v252
        %704 = vmatprep.subr.mxu0 %v249
        %705 = vmatpush2.msra.mxu0 %v248
        %706 = vmatprep.subr.mxu0 %v245
        %707 = vmatpush2.msra.mxu0 %v244
        %708 = vmatprep.subr.mxu0 %v241
        %709 = vmatpush2.msra.mxu0 %v240
        %710 = vmatprep.subr.mxu0 %v237
        %711 = vmatpush2.msra.mxu0 %v236
        %712 = vmatprep.subr.mxu0 %v233
        %713 = vmatpush2.msra.mxu0 %v232
        %714 = vmatprep.subr.mxu0 %v229
        %715 = vmatpush2.msra.mxu0 %v228
        %716 = vmatprep.mubr.f32.mxu0 %v158
        %717 = vmatmul.mubr.f32.gmra.mxu0 %v157
        %v718 = vpop.f32.mrf.mxu0
        %v719 = vadd.f32 0.0, %v718
        %v720 = vpop.f32.mrf.mxu0
        %v721 = vadd.f32 0.0, %v720
        %722 = vdwg.mxu0
        %723 = vmatprep.subr.mxu0 %v353
        %724 = vmatpush1.msra.mxu0 %v352
        %725 = vmatprep.subr.mxu0 %v349
        %726 = vmatpush1.msra.mxu0 %v348
        %727 = vmatprep.subr.mxu0 %v345
        %728 = vmatpush1.msra.mxu0 %v344
        %729 = vmatprep.subr.mxu0 %v341
        %730 = vmatpush1.msra.mxu0 %v340
        %731 = vmatprep.subr.mxu0 %v337
        %732 = vmatpush1.msra.mxu0 %v336
        %733 = vmatprep.subr.mxu0 %v333
        %734 = vmatpush1.msra.mxu0 %v332
        %735 = vmatprep.subr.mxu0 %v329
        %736 = vmatpush1.msra.mxu0 %v328
        %737 = vmatprep.subr.mxu0 %v325
        %738 = vmatpush1.msra.mxu0 %v324
        %739 = vmatprep.subr.mxu0 %v321
        %740 = vmatpush1.msra.mxu0 %v320
        %741 = vmatprep.subr.mxu0 %v317
        %742 = vmatpush1.msra.mxu0 %v316
        %743 = vmatprep.subr.mxu0 %v313
        %744 = vmatpush1.msra.mxu0 %v312
        %745 = vmatprep.subr.mxu0 %v309
        %746 = vmatpush1.msra.mxu0 %v308
        %747 = vmatprep.subr.mxu0 %v305
        %748 = vmatpush1.msra.mxu0 %v304
        %749 = vmatprep.subr.mxu0 %v301
        %750 = vmatpush1.msra.mxu0 %v300
        %751 = vmatprep.subr.mxu0 %v297
        %752 = vmatpush1.msra.mxu0 %v296
        %753 = vmatprep.subr.mxu0 %v293
        %754 = vmatpush1.msra.mxu0 %v292
        %755 = vmatprep.subr.mxu0 %v417
        %756 = vmatpush2.msra.mxu0 %v416
        %757 = vmatprep.subr.mxu0 %v413
        %758 = vmatpush2.msra.mxu0 %v412
        %759 = vmatprep.subr.mxu0 %v409
        %760 = vmatpush2.msra.mxu0 %v408
        %761 = vmatprep.subr.mxu0 %v405
        %762 = vmatpush2.msra.mxu0 %v404
        %763 = vmatprep.subr.mxu0 %v401
        %764 = vmatpush2.msra.mxu0 %v400
        %765 = vmatprep.subr.mxu0 %v397
        %766 = vmatpush2.msra.mxu0 %v396
        %767 = vmatprep.subr.mxu0 %v393
        %768 = vmatpush2.msra.mxu0 %v392
        %769 = vmatprep.subr.mxu0 %v389
        %770 = vmatpush2.msra.mxu0 %v388
        %771 = vmatprep.subr.mxu0 %v385
        %772 = vmatpush2.msra.mxu0 %v384
        %773 = vmatprep.subr.mxu0 %v381
        %774 = vmatpush2.msra.mxu0 %v380
        %775 = vmatprep.subr.mxu0 %v377
        %776 = vmatpush2.msra.mxu0 %v376
        %777 = vmatprep.subr.mxu0 %v373
        %778 = vmatpush2.msra.mxu0 %v372
        %779 = vmatprep.subr.mxu0 %v369
        %780 = vmatpush2.msra.mxu0 %v368
        %781 = vmatprep.subr.mxu0 %v365
        %782 = vmatpush2.msra.mxu0 %v364
        %783 = vmatprep.subr.mxu0 %v361
        %784 = vmatpush2.msra.mxu0 %v360
        %785 = vmatprep.subr.mxu0 %v357
        %786 = vmatpush2.msra.mxu0 %v356
        %787 = vmatprep.mubr.f32.mxu0 %v160
        %788 = vmatmul.mubr.f32.gmra.mxu0 %v159
        %v789 = vpop.f32.mrf.mxu0
        %v790 = vadd.f32 %v719, %v789
        %v791 = vpop.f32.mrf.mxu0
        %v792 = vadd.f32 %v721, %v791
        %793 = vdwg.mxu0
        %794 = vmatprep.subr.mxu0 0.0
        %795 = vmatpush1.msra.mxu0 0.0
        %796 = vmatprep.subr.mxu0 0.0
        %797 = vmatpush1.msra.mxu0 0.0
        %798 = vmatprep.subr.mxu0 0.0
        %799 = vmatpush1.msra.mxu0 0.0
        %800 = vmatprep.subr.mxu0 0.0
        %801 = vmatpush1.msra.mxu0 0.0
        %802 = vmatprep.subr.mxu0 0.0
        %803 = vmatpush1.msra.mxu0 0.0
        %804 = vmatprep.subr.mxu0 0.0
        %805 = vmatpush1.msra.mxu0 0.0
        %806 = vmatprep.subr.mxu0 0.0
        %807 = vmatpush1.msra.mxu0 0.0
        %808 = vmatprep.subr.mxu0 0.0
        %809 = vmatpush1.msra.mxu0 0.0
        %810 = vmatprep.subr.mxu0 0.0
        %811 = vmatpush1.msra.mxu0 0.0
        %812 = vmatprep.subr.mxu0 0.0
        %813 = vmatpush1.msra.mxu0 0.0
        %814 = vmatprep.subr.mxu0 0.0
        %815 = vmatpush1.msra.mxu0 0.0
        %816 = vmatprep.subr.mxu0 0.0
        %817 = vmatpush1.msra.mxu0 0.0
        %818 = vmatprep.subr.mxu0 0.0
        %819 = vmatpush1.msra.mxu0 0.0
        %820 = vmatprep.subr.mxu0 0.0
        %821 = vmatpush1.msra.mxu0 0.0
        %822 = vmatprep.subr.mxu0 0.0
        %823 = vmatpush1.msra.mxu0 0.0
        %824 = vmatprep.subr.mxu0 %v437
        %825 = vmatpush1.msra.mxu0 %v434
        %826 = vmatprep.subr.mxu0 0.0
        %827 = vmatpush2.msra.mxu0 0.0
        %828 = vmatprep.subr.mxu0 0.0
        %829 = vmatpush2.msra.mxu0 0.0
        %830 = vmatprep.subr.mxu0 0.0
        %831 = vmatpush2.msra.mxu0 0.0
        %832 = vmatprep.subr.mxu0 0.0
        %833 = vmatpush2.msra.mxu0 0.0
        %834 = vmatprep.subr.mxu0 0.0
        %835 = vmatpush2.msra.mxu0 0.0
        %836 = vmatprep.subr.mxu0 0.0
        %837 = vmatpush2.msra.mxu0 0.0
        %838 = vmatprep.subr.mxu0 0.0
        %839 = vmatpush2.msra.mxu0 0.0
        %840 = vmatprep.subr.mxu0 0.0
        %841 = vmatpush2.msra.mxu0 0.0
        %842 = vmatprep.subr.mxu0 0.0
        %843 = vmatpush2.msra.mxu0 0.0
        %844 = vmatprep.subr.mxu0 0.0
        %845 = vmatpush2.msra.mxu0 0.0
        %846 = vmatprep.subr.mxu0 0.0
        %847 = vmatpush2.msra.mxu0 0.0
        %848 = vmatprep.subr.mxu0 0.0
        %849 = vmatpush2.msra.mxu0 0.0
        %850 = vmatprep.subr.mxu0 0.0
        %851 = vmatpush2.msra.mxu0 0.0
        %852 = vmatprep.subr.mxu0 0.0
        %853 = vmatpush2.msra.mxu0 0.0
        %854 = vmatprep.subr.mxu0 0.0
        %855 = vmatpush2.msra.mxu0 0.0
        %856 = vmatprep.subr.mxu0 0.0
        %857 = vmatpush2.msra.mxu0 0.0
        %858 = vmatprep.mubr.f32.mxu0 0.0
        %859 = vmatmul.mubr.f32.gmra.mxu0 %v424
        %v860 = vpop.f32.mrf.mxu0
        %v861 = vadd.f32 %v790, %v860
        %v862 = vpop.f32.mrf.mxu0
        %v863 = vadd.f32 %v792, %v862
        %864 = vdwg.mxu0
        %865 = vst [vmem:[%s156] sm:$0x7f] %v861
        %v866 = vld [vmem:[%s156] sm:$0x3f]
        %v868 = vrot.slane %v648, 2
        %v870 = vadd.f32 %v866, %v868
        %871 = vst [vmem:[%s156] sm:$0x3f] %v870
        %v872 = vld [vmem:[%s156] sm:$0x7f]
        %v874 = vrot.slane %v650, 1
        %v876 = vadd.f32 %v872, %v874
        %877 = vst [vmem:[%s156] sm:$0x7f] %v876
        %v878 = vld [vmem:[%s156 + $0x1] sm:$0x3f]
        %v879 = vadd.f32 %v878, %v863
        %880 = vst [vmem:[%s156 + $0x1] sm:$0x3f] %v879
        %p881 = scmp.lt.s32.totalorder %s14, 1
        %s882 = scalar_select %p881, %s14, 1
        %s883 = smul.addr %s882, 8
        %s884 = scalar_lea.vmem %s2, %s883
        // Predicated region
        $region33: #{conv_istft.1} parent=27 // pred_check
          %p885 = pneg %p79
        $region34: #{conv_istft.1} parent=27 // pred_check_branch
          %887 = sbr.rel (%p885) target = $region36
        $region35: #{conv_istft.1} parent=27 // pred_region
          _
        $region36: #{conv_istft.1} parent=27 // pred_fallthru
          _
      $region28: #{conv_istft.1} parent=5 // pred_fallthru
        _
      %p888 = scmp.le.s32.totalorder 2, %s9
      // Predicated region
      $region37: #{conv_istft.1} parent=5 // pred_check
        %p889 = pneg %p888
      $region38: #{conv_istft.1} parent=5 // pred_check_branch
        %891 = sbr.rel (%p889) target = $region40
      $region39: #{conv_istft.1} parent=5 // pred_region
        %s892 = ssub.s32 %s9, 2
        // Predicated region
        $region41: #{conv_istft.1} parent=39 // pred_check
          %p893 = pneg %p85
        $region42: #{conv_istft.1} parent=39 // pred_check_branch
          %895 = sbr.rel (%p893) target = $region44
        $region43: #{conv_istft.1} parent=39 // pred_region
          %p896 = scmp.lt.s32.totalorder %s15, 1
          %s897 = scalar_select %p896, %s15, 1
          %s898 = smul.addr %s897, 8
          %s899 = scalar_lea.vmem %s2, %s898
        $region44: #{conv_istft.1} parent=39 // pred_fallthru
          _
      $region40: #{conv_istft.1} parent=5 // pred_fallthru
        _
    $region6: #{conv_istft.1} parent=1 // loop_footer
      %s13 = sadd.s32 1, %s9
    $region7: #{conv_istft.1} parent=1 // loop_footer_branch
      %8 = sbr.rel target = $region3
    $region8: #{conv_istft.1} parent=1 // loop_exit
      _
    %900 = vsyncpa [#allocation3], 1
    %s901 = scalar_lea.sflag [#allocation3], 1
    %902 = vsyncpa %s901, 1

</llo_original>
